<compile_context>
chip_gen: v6e
topology: v6e:2x2x1
jax: 0.10.0
libtpu: 0.0.40
codegen_flags: <defaults>
</compile_context>

<pallas_src>
import functools

import jax
import jax.numpy as jnp
from jax import lax
from jax.experimental import pallas as pl
from jax.experimental.pallas import tpu as pltpu

_LANE = 128                       # lane width / tile size (nodes and channels)
_TILE = 128                       # node tile (TN = TQ = TK)
_VMEM_LIMIT = 32 * 1024 * 1024    # explicit scoped-VMEM budget (safe on v5e..v7x)
_MASK_VAL = -3.0e38               # masked logit (exp underflows to exactly 0)
_M_INIT = -1.0e30                 # finite init for the online-softmax running max


def _round_up(v, m):
    return ((v + m - 1) // m) * m


# ----------------------------------------------------------------------------
# Kernel 1: per-node transform (channel linear + pooled descriptors + values)
# ----------------------------------------------------------------------------
def _node_kernel(x_ref, wx_ref, b1_ref, wh_ref, q_out_ref, k_out_ref, *, cw, cp):
    """x: (TN, CW) f32 slab.  WX = [W1 | Wres] bf16, WH = [poolqk | pool | Wv2] bf16.

    Outputs: q slab = [t | res] (TN, CP+CW), k slab = [hp | v] (TN, CP+CW)."""
    x_bf = x_ref[...].astype(jnp.bfloat16)
    xw = jnp.dot(x_bf, wx_ref[...],
                 preferred_element_type=jnp.float32)          # (TN, 2*CW) = [h_pre | res]
    h = jnp.maximum(xw[:, :cw] + b1_ref[...], 0.0)            # per-stream linear + ReLU
    hw = jnp.dot(h.astype(jnp.bfloat16), wh_ref[...],
                 preferred_element_type=jnp.float32)          # (TN, 2*CP+CW) = [t | hp | v]
    q_out_ref[:, :cp] = hw[:, :cp]                            # t  (query descriptor, scaled)
    q_out_ref[:, cp:] = xw[:, cw:]                            # res (residual branch)
    k_out_ref[...] = hw[:, cp:]                               # [hp | v]


def _node_transform_call(x2, wx, b1, wh, *, cw, cp, tn=_TILE):
    n_pad = x2.shape[0]
    qk_cols = cp + cw
    kernel = functools.partial(_node_kernel, cw=cw, cp=cp)
    return pl.pallas_call(
        kernel,
        out_shape=(jax.ShapeDtypeStruct((n_pad, qk_cols), jnp.float32),
                   jax.ShapeDtypeStruct((n_pad, qk_cols), jnp.float32)),
        grid_spec=pltpu.PrefetchScalarGridSpec(
            num_scalar_prefetch=0,
            grid=(n_pad // tn,),
            in_specs=[
                pl.BlockSpec((tn, cw), lambda i: (i, 0)),
                pl.BlockSpec((cw, 2 * cw), lambda i: (0, 0)),
                pl.BlockSpec((1, cw), lambda i: (0, 0)),
                pl.BlockSpec((cw, 2 * cp + cw), lambda i: (0, 0)),
            ],
            out_specs=[
                pl.BlockSpec((tn, qk_cols), lambda i: (i, 0)),
                pl.BlockSpec((tn, qk_cols), lambda i: (i, 0)),
            ]),
        compiler_params=pltpu.CompilerParams(
            dimension_semantics=("parallel",),
            vmem_limit_bytes=_VMEM_LIMIT),
    )(x2, wx, b1, wh)


# ----------------------------------------------------------------------------
# Kernel 2: masked graph attention, flash-style (online softmax over key tiles)
# ----------------------------------------------------------------------------
def _attn_kernel(q_ref, k_ref, mask_ref, b2_ref, o_ref,
                 m_sc, l_sc, acc_sc, *, cp, relu_out):
    ki = pl.program_id(1)

    @pl.when(ki == 0)
    def _():
        m_sc[...] = jnp.full(m_sc.shape, _M_INIT, jnp.float32)
        l_sc[...] = jnp.zeros(l_sc.shape, jnp.float32)
        acc_sc[...] = jnp.zeros(acc_sc.shape, jnp.float32)

    t = q_ref[:, :cp]                                          # (TQ, CP) scaled q descriptor
    hp = k_ref[:, :cp]                                         # (TK, CP) pooled k descriptor
    v = k_ref[:, cp:]                                          # (TK, CW) folded values

    # scores via dot_general contracting the last dims: no explicit hp.T transpose.
    s = lax.dot_general(t.astype(jnp.bfloat16), hp.astype(jnp.bfloat16),
                        dimension_numbers=(((1,), (1,)), ((), ())),
                        preferred_element_type=jnp.float32)    # (TQ, TK)
    s = jnp.where(mask_ref[...] != 0, s, _MASK_VAL)            # int8 mask, no *adj multiply

    m_prev = m_sc[...]
    m_new = jnp.maximum(m_prev, jnp.max(s, axis=-1, keepdims=True))
    alpha = jnp.exp(m_prev - m_new)
    p = jnp.exp(s - m_new)                                     # masked entries -> exactly 0
    l_sc[...] = alpha * l_sc[...] + jnp.sum(p, axis=-1, keepdims=True)
    acc_sc[...] = alpha * acc_sc[...] + jnp.dot(
        p.astype(jnp.bfloat16), v.astype(jnp.bfloat16),
        preferred_element_type=jnp.float32)
    m_sc[...] = m_new

    @pl.when(ki == pl.num_programs(1) - 1)
    def _():
        inv = pl.reciprocal(l_sc[...], approx=True)            # self-loops => l > 0
        y = acc_sc[...] * inv + b2_ref[...] + q_ref[:, cp:]    # + bias + residual
        if relu_out:
            y = jnp.maximum(y, 0.0)
        o_ref[...] = y


def _attention_call(qslab, kslab, mask, b2, *, cw, cp, relu_out,
                    tq=_TILE, tk=_TILE):
    n_pad = qslab.shape[0]
    qk_cols = cp + cw
    kernel = functools.partial(_attn_kernel, cp=cp, relu_out=relu_out)
    return pl.pallas_call(
        kernel,
        out_shape=jax.ShapeDtypeStruct((n_pad, cw), jnp.float32),
        grid_spec=pltpu.PrefetchScalarGridSpec(
            num_scalar_prefetch=0,
            grid=(n_pad // tq, n_pad // tk),
            in_specs=[
                pl.BlockSpec((tq, qk_cols), lambda qi, ki: (qi, 0)),
                pl.BlockSpec((tk, qk_cols), lambda qi, ki: (ki, 0)),
                pl.BlockSpec((tq, tk), lambda qi, ki: (qi, ki)),
                pl.BlockSpec((1, cw), lambda qi, ki: (0, 0)),
            ],
            out_specs=pl.BlockSpec((tq, cw), lambda qi, ki: (qi, 0)),
            scratch_shapes=[pltpu.VMEM((tq, 1), jnp.float32),
                            pltpu.VMEM((tq, 1), jnp.float32),
                            pltpu.VMEM((tq, cw), jnp.float32)]),
        compiler_params=pltpu.CompilerParams(
            dimension_semantics=("parallel", "arbitrary"),
            vmem_limit_bytes=_VMEM_LIMIT),
    )(qslab, kslab, mask, b2)


# ----------------------------------------------------------------------------
# Parameter construction + trace-time weight folding (plain JAX)
# ----------------------------------------------------------------------------
def _init_block_params(key, c_in, c_mid, c_out):
    ks = jax.random.split(key, 6)

    def lin(k, fi, fo):
        return (jax.random.normal(k, (fi, fo), jnp.float32) /
                jnp.sqrt(jnp.float32(fi)))

    return dict(
        w1=lin(ks[0], c_in, c_mid), b1=jnp.zeros((1, c_mid), jnp.float32),
        wq=lin(ks[1], c_mid, c_mid), wk=lin(ks[2], c_mid, c_mid),
        wv=lin(ks[3], c_mid, c_mid),
        w2=lin(ks[4], c_mid, c_out), b2=jnp.zeros((1, c_out), jnp.float32),
        wres=lin(ks[5], c_in, c_out),
    )


def _fold_block_params(p, M, cw, cp, mxu_dtype=jnp.bfloat16):
    """Fold per-stream linears into block-diagonal weights, collapse the q/k and
    v/w2 chains, fold pool@wqk and the 1/sqrt(c_mid) scale, and zero-pad every
    matrix to lane-dense (CW/CP) shapes.  Exactly equivalent for the single-head,
    no-dropout, no-batch-norm block implemented here."""
    c_in, c_mid = p["w1"].shape
    eye_m = jnp.eye(M, dtype=jnp.float32)

    def pad2(a, rows, cols):
        out = jnp.zeros((rows, cols), jnp.float32)
        return out.at[:a.shape[0], :a.shape[1]].set(a)

    w1_blk = jnp.kron(eye_m, p["w1"])                            # (M*Cin, M*Cmid)
    wres_blk = jnp.kron(eye_m, p["wres"])                        # (M*Cin, M*Cout)
    wv2_blk = jnp.kron(eye_m, p["wv"] @ p["w2"])                 # (M*Cmid, M*Cout)
    pool = jnp.kron(jnp.ones((M, 1), jnp.float32) / M,
                    jnp.eye(c_mid, dtype=jnp.float32))           # (M*Cmid, Cmid)
    poolqk = (pool @ (p["wq"] @ p["wk"].T)) * (1.0 / float(c_mid) ** 0.5)

    wx = jnp.concatenate([pad2(w1_blk, cw, cw),
                          pad2(wres_blk, cw, cw)], axis=1)        # (CW, 2*CW)
    wh = jnp.concatenate([pad2(poolqk, cw, cp),
                          pad2(pool, cw, cp),
                          pad2(wv2_blk, cw, cw)], axis=1)         # (CW, 2*CP+CW)
    b1 = pad2(jnp.tile(p["b1"], (1, M)), 1, cw)                   # (1, CW) f32
    b2 = pad2(jnp.tile(p["b2"], (1, M)), 1, cw)                   # (1, CW) f32
    return wx.astype(mxu_dtype), b1, wh.astype(mxu_dtype), b2


class EMANPallas:
    def __init__(self, block_dims, block_orders, reltan_features, null_isolated,
                 n_rings, band_limit, num_samples, checkpoint, node_batch_size,
                 equiv_bias, regular_non_lin, batch_norm, dropout, n_heads,
                 final_activation, *, key):
        assert len(block_dims) >= 3 and len(block_dims) == len(block_orders)
        self.block_dims = block_dims
        self.block_orders = block_orders
        self.out_dim = block_dims[-1]
        self.null_isolated = null_isolated
        self.final_activation = final_activation
        # TODO(synk): GemPrecomp ring/band-limited kernels (n_rings, band_limit,
        # num_samples), n_heads>1, equiv_bias, batch_norm, dropout, checkpoint and
        # node_batch_size are not reproduced in this simplified block.
        self.M = 2 * block_orders[0] + 1                 # streams (order assumed const)
        n_blocks = len(block_dims) - 2
        # Common padded slab widths (lane-dense across the whole block chain).
        self.cw = _round_up(self.M * max(block_dims), _LANE)
        self.cp = _round_up(max(block_dims[1:-1]), _LANE)
        keys = jax.random.split(key, n_blocks)
        self.folded, self.block_final_act = [], []
        for i in range(n_blocks):
            p = _init_block_params(keys[i], block_dims[i], block_dims[i + 1],
                                   block_dims[i + 2])
            self.folded.append(_fold_block_params(p, self.M, self.cw, self.cp))
            self.block_final_act.append(
                True if i < n_blocks - 1 else final_activation)

    def __call__(self, x, edge_index):
        N, M, c_in = x.shape
        assert M == self.M and c_in == self.block_dims[0]
        cw, cp = self.cw, self.cp
        n_pad = _round_up(N, _TILE)

        if self.null_isolated:
            non_isol = jnp.zeros((N,), bool).at[edge_index.reshape(-1)].set(True)
            x = jnp.where(non_isol[:, None, None], x, 0.0)

        # --- GemPrecomp stand-in: int8 symmetric adjacency mask w/ self-loops ---
        mask = jnp.zeros((n_pad, n_pad), jnp.int8)
        mask = mask.at[edge_index[0], edge_index[1]].set(1)
        mask = jnp.maximum(mask, mask.T)
        mask = jnp.maximum(mask, jnp.eye(n_pad, dtype=jnp.int8))

        # Lane-dense, zero-padded (n_pad, CW) activation slab (streams in columns).
        x2 = jnp.zeros((n_pad, cw), jnp.float32)
        x2 = x2.at[:N, :M * c_in].set(x.reshape(N, M * c_in))

        for (wx, b1, wh, b2), relu_out in zip(self.folded, self.block_final_act):
            qslab, kslab = _node_transform_call(x2, wx, b1, wh, cw=cw, cp=cp)
            x2 = _attention_call(qslab, kslab, mask, b2,
                                 cw=cw, cp=cp, relu_out=bool(relu_out))

        return x2[:N, :M * self.out_dim].reshape(N, M, self.out_dim)


# ----------------------------------------------------------------------------
# Demo
# ----------------------------------------------------------------------------
if __name__ == "__main__":
    key = jax.random.PRNGKey(0)
    k_x, k_e, k_p = jax.random.split(key, 3)

    block_dims = [8, 16, 16, 8]          # >= 3 entries -> 2 ResNet blocks
    block_orders = [2, 2, 2, 2]
    M = 2 * block_orders[0] + 1          # rotation-order streams per node
    N, E = 16, 40                        # nodes / directed edges

    x = jax.random.normal(k_x, (N, M, block_dims[0]), jnp.float32)
    # node N-1 is deliberately isolated (exercises null_isolated path)
    edge_index = jax.random.randint(k_e, (2, E), 0, N - 1, jnp.int32)

    model = EMANPallas(block_dims, block_orders,
                       reltan_features=False, null_isolated=True,
                       n_rings=2, band_limit=2, num_samples=7,
                       checkpoint=False, node_batch_size=None,
                       equiv_bias=False, regular_non_lin=True,
                       batch_norm=False, dropout=0.0, n_heads=1,
                       final_activation=False, key=k_p)

    out = model(x, edge_index)
    out = jax.block_until_ready(out)
    assert out.shape == (N, M, block_dims[-1])
    assert bool(jnp.all(jnp.isfinite(out)))
    print("KERNEL_OK")
</pallas_src>

<mosaic_0001>
module attributes {stable_mosaic.version = 11 : i64} {
  func.func @_node_kernel(%arg0: i32, %arg1: memref<128x128xf32, #tpu.memory_space<vmem>>, %arg2: memref<128x256xbf16, #tpu.memory_space<vmem>>, %arg3: memref<1x128xf32, #tpu.memory_space<vmem>>, %arg4: memref<128x384xbf16, #tpu.memory_space<vmem>>, %arg5: memref<128x256xf32, #tpu.memory_space<vmem>>, %arg6: memref<128x256xf32, #tpu.memory_space<vmem>>) attributes {dimension_semantics = [#tpu.dimension_semantics<parallel>], iteration_bounds = array<i64: 1>, scalar_prefetch = 0 : i64, scratch_operands = 0 : i64, tpu.core_type = #tpu.core_type<tc>, window_params = [{transform_indices = @transform_0, window_bounds = array<i64: 128, 128>}, {pipeline_mode = #tpu.pipeline_mode<synchronous>, transform_indices = @transform_1, window_bounds = array<i64: 128, 256>}, {pipeline_mode = #tpu.pipeline_mode<synchronous>, transform_indices = @transform_2, window_bounds = array<i64: 1, 128>}, {pipeline_mode = #tpu.pipeline_mode<synchronous>, transform_indices = @transform_3, window_bounds = array<i64: 128, 384>}, {transform_indices = @transform_4, window_bounds = array<i64: 128, 256>}, {transform_indices = @transform_5, window_bounds = array<i64: 128, 256>}]} {
    %c0 = arith.constant 0 : index
    %c0_0 = arith.constant 0 : index
    %0 = vector.load %arg1[%c0, %c0_0] : memref<128x128xf32, #tpu.memory_space<vmem>>, vector<128x128xf32>
    %1 = arith.truncf %0 : vector<128x128xf32> to vector<128x128xbf16>
    %c0_1 = arith.constant 0 : index
    %c0_2 = arith.constant 0 : index
    %2 = vector.load %arg2[%c0_1, %c0_2] : memref<128x256xbf16, #tpu.memory_space<vmem>>, vector<128x256xbf16>
    %cst = arith.constant dense<0.000000e+00> : vector<128x256xf32>
    %3 = tpu.matmul %1, %2, %cst {dimension_numbers = #tpu.dot_dimension_numbers<[1], [0], [0], [1], [0, 0, 1, 1], [], []>} : vector<128x128xbf16>, vector<128x256xbf16>, vector<128x256xf32> -> vector<128x256xf32>
    %4 = vector.extract_strided_slice %3 {offsets = [0, 0], sizes = [128, 128], strides = [1, 1]} : vector<128x256xf32> to vector<128x128xf32>
    %c0_3 = arith.constant 0 : index
    %c0_4 = arith.constant 0 : index
    %5 = vector.load %arg3[%c0_3, %c0_4] : memref<1x128xf32, #tpu.memory_space<vmem>>, vector<1x128xf32>
    %6 = vector.broadcast %5 : vector<1x128xf32> to vector<128x128xf32>
    %7 = arith.addf %4, %6 : vector<128x128xf32>
    %cst_5 = arith.constant 0.000000e+00 : f32
    %8 = vector.broadcast %cst_5 : f32 to vector<128x128xf32>
    %9 = arith.maximumf %7, %8 : vector<128x128xf32>
    %10 = arith.truncf %9 : vector<128x128xf32> to vector<128x128xbf16>
    %c0_6 = arith.constant 0 : index
    %c0_7 = arith.constant 0 : index
    %11 = vector.load %arg4[%c0_6, %c0_7] : memref<128x384xbf16, #tpu.memory_space<vmem>>, vector<128x384xbf16>
    %cst_8 = arith.constant dense<0.000000e+00> : vector<128x384xf32>
    %12 = tpu.matmul %10, %11, %cst_8 {dimension_numbers = #tpu.dot_dimension_numbers<[1], [0], [0], [1], [0, 0, 1, 1], [], []>} : vector<128x128xbf16>, vector<128x384xbf16>, vector<128x384xf32> -> vector<128x384xf32>
    %13 = vector.extract_strided_slice %12 {offsets = [0, 0], sizes = [128, 128], strides = [1, 1]} : vector<128x384xf32> to vector<128x128xf32>
    %c0_9 = arith.constant 0 : index
    %c0_10 = arith.constant 0 : index
    %14 = vector.load %arg5[%c0_9, %c0_10] : memref<128x256xf32, #tpu.memory_space<vmem>>, vector<128x128xf32>
    tpu.vector_store %arg5[%c0_9, %c0_10], %13 {strides = array<i32>} : memref<128x256xf32, #tpu.memory_space<vmem>>, vector<128x128xf32>,
    %15 = vector.extract_strided_slice %3 {offsets = [0, 128], sizes = [128, 128], strides = [1, 1]} : vector<128x256xf32> to vector<128x128xf32>
    %c0_11 = arith.constant 0 : index
    %c128 = arith.constant 128 : index
    %16 = vector.load %arg5[%c0_11, %c128] : memref<128x256xf32, #tpu.memory_space<vmem>>, vector<128x128xf32>
    tpu.vector_store %arg5[%c0_11, %c128], %15 {strides = array<i32>} : memref<128x256xf32, #tpu.memory_space<vmem>>, vector<128x128xf32>,
    %17 = vector.extract_strided_slice %12 {offsets = [0, 128], sizes = [128, 256], strides = [1, 1]} : vector<128x384xf32> to vector<128x256xf32>
    %c0_12 = arith.constant 0 : index
    %c0_13 = arith.constant 0 : index
    %18 = vector.load %arg6[%c0_12, %c0_13] : memref<128x256xf32, #tpu.memory_space<vmem>>, vector<128x256xf32>
    tpu.vector_store %arg6[%c0_12, %c0_13], %17 {strides = array<i32>} : memref<128x256xf32, #tpu.memory_space<vmem>>, vector<128x256xf32>,
    return
  }
  func.func @transform_0(%arg0: i32) -> (i32, i32) {
    %c0_i32 = arith.constant 0 : i32
    %c0_i32_0 = arith.constant 0 : i32
    return %arg0, %c0_i32 : i32, i32
  }
  func.func @transform_1(%arg0: i32) -> (i32, i32) {
    %c0_i32 = arith.constant 0 : i32
    %c0_i32_0 = arith.constant 0 : i32
    %c0_i32_1 = arith.constant 0 : i32
    return %c0_i32, %c0_i32_0 : i32, i32
  }
  func.func @transform_2(%arg0: i32) -> (i32, i32) {
    %c0_i32 = arith.constant 0 : i32
    %c0_i32_0 = arith.constant 0 : i32
    %c0_i32_1 = arith.constant 0 : i32
    return %c0_i32, %c0_i32_0 : i32, i32
  }
  func.func @transform_3(%arg0: i32) -> (i32, i32) {
    %c0_i32 = arith.constant 0 : i32
    %c0_i32_0 = arith.constant 0 : i32
    %c0_i32_1 = arith.constant 0 : i32
    return %c0_i32, %c0_i32_0 : i32, i32
  }
  func.func @transform_4(%arg0: i32) -> (i32, i32) {
    %c0_i32 = arith.constant 0 : i32
    %c0_i32_0 = arith.constant 0 : i32
    return %arg0, %c0_i32 : i32, i32
  }
  func.func @transform_5(%arg0: i32) -> (i32, i32) {
    %c0_i32 = arith.constant 0 : i32
    %c0_i32_0 = arith.constant 0 : i32
    return %arg0, %c0_i32 : i32, i32
  }
}

</mosaic_0001>

<llo_original>
// kernel: tpu_custom_call.1
$region0: #{tpu_custom_call.1}
  #allocation0 [shape = 'u32[]', space=smem, size = 0x4, offset = 0x4, fixed_abs, tag = 'smem constant byte address 0x4 - core index']
  #allocation1 [shape = 'u32[144,128]{1,0:T(1,128)}', space=vmem, size = 0x12000, scoped, tag = 'internal scratch']
  %s0 = inlined_call_operand.hbm [shape: f32[128,128], index: 0, kind: input, shape index: {}]
  %s1 = inlined_call_operand.hbm [shape: bf16[128,256], index: 1, kind: input, shape index: {}]
  %s2 = inlined_call_operand.vmem [shape: f32[1,128], index: 2, kind: input, shape index: {}]
  %s3 = inlined_call_operand.hbm [shape: bf16[128,384], index: 3, kind: input, shape index: {}]
  %s4 = inlined_call_operand.hbm [shape: f32[128,256], index: 4, kind: output, shape index: {0}]
  %s5 = inlined_call_operand.hbm [shape: f32[128,256], index: 5, kind: output, shape index: {1}]
  %6 = xla_tuple %s4, %s5
  %s7 = sld [smem:[#allocation0]]
  $region46: #{tpu_custom_call.1} parent=0
    _
  %s9 = ssub.s32 1, %s7
  %s10 = scalar_select 0, %s9, %s7
  $region1: #{tpu_custom_call.1} parent=0
    #allocation2 [shape = 'u8[65536]{0}', space=vmem, size = 0x10000, scoped, tag = 'input window, operand 0, single buffered']
    #allocation3 [shape = 's32[1]{0}', space=sflag, size = 0x4, scoped, tag = 'scoped memory for tpu_custom_call.1']
    #allocation4 [shape = 's32[1]{0}', space=sflag, size = 0x4, scoped, tag = 'scoped memory for tpu_custom_call.1']
    #allocation5 [shape = 'u8[65536]{0}', space=vmem, size = 0x10000, scoped, tag = 'input window, operand 1, single buffered']
    #allocation6 [shape = 's32[1]{0}', space=sflag, size = 0x4, scoped, tag = 'scoped memory for tpu_custom_call.1']
    #allocation7 [shape = 'u8[98304]{0}', space=vmem, size = 0x18000, scoped, tag = 'input window, operand 3, single buffered']
    #allocation8 [shape = 'u8[131072]{0}', space=vmem, size = 0x20000, scoped, tag = 'output window, operand 0, single buffered']
    #allocation9 [shape = 'u8[131072]{0}', space=vmem, size = 0x20000, scoped, tag = 'output window, operand 1, single buffered']
    #allocation10 [shape = 's32[1]{0}', space=sflag, size = 0x4, scoped, tag = 'scoped memory for tpu_custom_call.1']
    %11 = vsyncpa [#allocation3], 0
    %12 = vsyncpa [#allocation6], 0
    %13 = vsyncpa [#allocation4], 0
    %14 = vsyncpa [#allocation10], 0
    // Predicated region
    $region2: #{tpu_custom_call.1} parent=1 // pred_check
      _
    $region3: #{tpu_custom_call.1} parent=1 // pred_check_branch
      %16 = sbr.rel (0) target = $region5
    $region4: #{tpu_custom_call.1} parent=1 // pred_region
      %s18 = ssub.s32 2048, 2048
      %19 = vsyncadd [#allocation3], %s18
      %s20 = sshll.u32 [#allocation2], 4
      %s21 = int_to_ptr.vmem [resolvable:$true] %s20
      %26 = dma.hbm_to_vmem [thread:$0]  %s0, 2048, %s21, [#allocation3], 128, 128, 8
    $region5: #{tpu_custom_call.1} parent=1 // pred_fallthru
      _
    // Predicated region
    $region6: #{tpu_custom_call.1} parent=1 // pred_check
      _
    $region7: #{tpu_custom_call.1} parent=1 // pred_check_branch
      %28 = sbr.rel (0) target = $region9
    $region8: #{tpu_custom_call.1} parent=1 // pred_region
      %s30 = ssub.s32 2048, 2048
      %31 = vsyncadd [#allocation6], %s30
      %s32 = sshll.u32 [#allocation5], 4
      %s33 = int_to_ptr.vmem [resolvable:$true] %s32
      %38 = dma.hbm_to_vmem [thread:$0]  %s1, 2048, %s33, [#allocation6], 128, 128, 8
    $region9: #{tpu_custom_call.1} parent=1 // pred_fallthru
      _
    // Predicated region
    $region10: #{tpu_custom_call.1} parent=1 // pred_check
      _
    $region11: #{tpu_custom_call.1} parent=1 // pred_check_branch
      %40 = sbr.rel (0) target = $region13
    $region12: #{tpu_custom_call.1} parent=1 // pred_region
      _
    $region13: #{tpu_custom_call.1} parent=1 // pred_fallthru
      _
    // Predicated region
    $region14: #{tpu_custom_call.1} parent=1 // pred_check
      _
    $region15: #{tpu_custom_call.1} parent=1 // pred_check_branch
      %42 = sbr.rel (0) target = $region17
    $region16: #{tpu_custom_call.1} parent=1 // pred_region
      %s44 = ssub.s32 3072, 3072
      %45 = vsyncadd [#allocation6], %s44
      %s46 = sshll.u32 [#allocation7], 4
      %s47 = int_to_ptr.vmem [resolvable:$true] %s46
      %52 = dma.hbm_to_vmem [thread:$0]  %s3, 3072, %s47, [#allocation6], 192, 192, 12
    $region17: #{tpu_custom_call.1} parent=1 // pred_fallthru
      _
    // Predicated region
    $region18: #{tpu_custom_call.1} parent=1 // pred_check
      _
    $region19: #{tpu_custom_call.1} parent=1 // pred_check_branch
      %54 = sbr.rel (0) target = $region21
    $region20: #{tpu_custom_call.1} parent=1 // pred_region
      %55 = dma.done [#allocation3], 2048
    $region21: #{tpu_custom_call.1} parent=1 // pred_fallthru
      _
    // Predicated region
    $region22: #{tpu_custom_call.1} parent=1 // pred_check
      _
    $region23: #{tpu_custom_call.1} parent=1 // pred_check_branch
      %57 = sbr.rel (0) target = $region25
    $region24: #{tpu_custom_call.1} parent=1 // pred_region
      %58 = dma.done [#allocation6], 2048
    $region25: #{tpu_custom_call.1} parent=1 // pred_fallthru
      _
    // Predicated region
    $region26: #{tpu_custom_call.1} parent=1 // pred_check
      _
    $region27: #{tpu_custom_call.1} parent=1 // pred_check_branch
      %60 = sbr.rel (0) target = $region29
    $region28: #{tpu_custom_call.1} parent=1 // pred_region
      %61 = dma.done [#allocation6], 3072
    $region29: #{tpu_custom_call.1} parent=1 // pred_fallthru
      _
    %v63 = vld [vmem:[#allocation2] sm:$0xff]
    %v64 = vld [vmem:[#allocation2 + $0x8] sm:$0xff]
    %v65 = vld [vmem:[#allocation2 + $0x10] sm:$0xff]
    %v66 = vld [vmem:[#allocation2 + $0x18] sm:$0xff]
    %v67 = vld [vmem:[#allocation2 + $0x20] sm:$0xff]
    %v68 = vld [vmem:[#allocation2 + $0x28] sm:$0xff]
    %v69 = vld [vmem:[#allocation2 + $0x30] sm:$0xff]
    %v70 = vld [vmem:[#allocation2 + $0x38] sm:$0xff]
    %v71 = vld [vmem:[#allocation2 + $0x40] sm:$0xff]
    %v72 = vld [vmem:[#allocation2 + $0x48] sm:$0xff]
    %v73 = vld [vmem:[#allocation2 + $0x50] sm:$0xff]
    %v74 = vld [vmem:[#allocation2 + $0x58] sm:$0xff]
    %v75 = vld [vmem:[#allocation2 + $0x60] sm:$0xff]
    %v76 = vld [vmem:[#allocation2 + $0x68] sm:$0xff]
    %v77 = vld [vmem:[#allocation2 + $0x70] sm:$0xff]
    %v78 = vld [vmem:[#allocation2 + $0x78] sm:$0xff]
    %v79 = vpack.c.bf16 %v64, %v63
    %v80 = vpack.c.bf16 %v66, %v65
    %v81 = vpack.c.bf16 %v68, %v67
    %v82 = vpack.c.bf16 %v70, %v69
    %v83 = vpack.c.bf16 %v72, %v71
    %v84 = vpack.c.bf16 %v74, %v73
    %v85 = vpack.c.bf16 %v76, %v75
    %v86 = vpack.c.bf16 %v78, %v77
    %v87 = vld [vmem:[#allocation5] sm:$0xff]
    %v88 = vld [vmem:[#allocation5 + $0x8] sm:$0xff]
    %v89 = vld [vmem:[#allocation5 + $0x10] sm:$0xff]
    %v90 = vld [vmem:[#allocation5 + $0x18] sm:$0xff]
    %v91 = vld [vmem:[#allocation5 + $0x20] sm:$0xff]
    %v92 = vld [vmem:[#allocation5 + $0x28] sm:$0xff]
    %v93 = vld [vmem:[#allocation5 + $0x30] sm:$0xff]
    %v94 = vld [vmem:[#allocation5 + $0x38] sm:$0xff]
    %v95 = vld [vmem:[#allocation5 + $0x40] sm:$0xff]
    %v96 = vld [vmem:[#allocation5 + $0x48] sm:$0xff]
    %v97 = vld [vmem:[#allocation5 + $0x50] sm:$0xff]
    %v98 = vld [vmem:[#allocation5 + $0x58] sm:$0xff]
    %v99 = vld [vmem:[#allocation5 + $0x60] sm:$0xff]
    %v100 = vld [vmem:[#allocation5 + $0x68] sm:$0xff]
    %v101 = vld [vmem:[#allocation5 + $0x70] sm:$0xff]
    %v102 = vld [vmem:[#allocation5 + $0x78] sm:$0xff]
    %v119 = vunpack.c.l.b16 %v87
    %v120 = vunpack.c.h.b16 %v87
    %v121 = vunpack.c.l.b16 %v88
    %v122 = vunpack.c.h.b16 %v88
    %v123 = vunpack.c.l.b16 %v89
    %v124 = vunpack.c.h.b16 %v89
    %v125 = vunpack.c.l.b16 %v90
    %v126 = vunpack.c.h.b16 %v90
    %v127 = vunpack.c.l.b16 %v91
    %v128 = vunpack.c.h.b16 %v91
    %v129 = vunpack.c.l.b16 %v92
    %v130 = vunpack.c.h.b16 %v92
    %v131 = vunpack.c.l.b16 %v93
    %v132 = vunpack.c.h.b16 %v93
    %v133 = vunpack.c.l.b16 %v94
    %v134 = vunpack.c.h.b16 %v94
    %v135 = vunpack.c.l.b16 %v95
    %v136 = vunpack.c.h.b16 %v95
    %v137 = vunpack.c.l.b16 %v96
    %v138 = vunpack.c.h.b16 %v96
    %v139 = vunpack.c.l.b16 %v97
    %v140 = vunpack.c.h.b16 %v97
    %v141 = vunpack.c.l.b16 %v98
    %v142 = vunpack.c.h.b16 %v98
    %v143 = vunpack.c.l.b16 %v99
    %v144 = vunpack.c.h.b16 %v99
    %v145 = vunpack.c.l.b16 %v100
    %v146 = vunpack.c.h.b16 %v100
    %v147 = vunpack.c.l.b16 %v101
    %v148 = vunpack.c.h.b16 %v101
    %v149 = vunpack.c.l.b16 %v102
    %v150 = vunpack.c.h.b16 %v102
    %v151 = vpack.c.b16 %v121, %v119
    %v152 = vpack.c.b16 %v122, %v120
    %v153 = vpack.c.b16 %v125, %v123
    %v154 = vpack.c.b16 %v126, %v124
    %v155 = vpack.c.b16 %v129, %v127
    %v156 = vpack.c.b16 %v130, %v128
    %v157 = vpack.c.b16 %v133, %v131
    %v158 = vpack.c.b16 %v134, %v132
    %v159 = vpack.c.b16 %v137, %v135
    %v160 = vpack.c.b16 %v138, %v136
    %v161 = vpack.c.b16 %v141, %v139
    %v162 = vpack.c.b16 %v142, %v140
    %v163 = vpack.c.b16 %v145, %v143
    %v164 = vpack.c.b16 %v146, %v144
    %v165 = vpack.c.b16 %v149, %v147
    %v166 = vpack.c.b16 %v150, %v148
    %183 = vmatprep.subr.bf16.mxu0 %v166
    %184 = vmatpush1.bf16.msra.mxu0 %v165
    %185 = vmatprep.subr.bf16.mxu0 %v164
    %186 = vmatpush1.bf16.msra.mxu0 %v163
    %187 = vmatprep.subr.bf16.mxu0 %v162
    %188 = vmatpush1.bf16.msra.mxu0 %v161
    %189 = vmatprep.subr.bf16.mxu0 %v160
    %190 = vmatpush1.bf16.msra.mxu0 %v159
    %191 = vmatprep.subr.bf16.mxu0 %v158
    %192 = vmatpush1.bf16.msra.mxu0 %v157
    %193 = vmatprep.subr.bf16.mxu0 %v156
    %194 = vmatpush1.bf16.msra.mxu0 %v155
    %195 = vmatprep.subr.bf16.mxu0 %v154
    %196 = vmatpush1.bf16.msra.mxu0 %v153
    %197 = vmatprep.subr.bf16.mxu0 %v152
    %198 = vmatpush1.bf16.msra.mxu0 %v151
    %199 = vmatprep.subr.bf16.mxu0 0
    %200 = vmatpush2.bf16.msra.mxu0 0
    %201 = vmatprep.subr.bf16.mxu0 0
    %202 = vmatpush2.bf16.msra.mxu0 0
    %203 = vmatprep.subr.bf16.mxu0 0
    %204 = vmatpush2.bf16.msra.mxu0 0
    %205 = vmatprep.subr.bf16.mxu0 0
    %206 = vmatpush2.bf16.msra.mxu0 0
    %207 = vmatprep.subr.bf16.mxu0 0
    %208 = vmatpush2.bf16.msra.mxu0 0
    %209 = vmatprep.subr.bf16.mxu0 0
    %210 = vmatpush2.bf16.msra.mxu0 0
    %211 = vmatprep.subr.bf16.mxu0 0
    %212 = vmatpush2.bf16.msra.mxu0 0
    %213 = vmatprep.subr.bf16.mxu0 0
    %214 = vmatpush2.bf16.msra.mxu0 0
    %215 = vmatprep.mubr.bf16.mxu0 0
    %216 = vmatmul.mubr.bf16.gmra.mxu0 %v79
    %v217 = vpop.f32.mrf.mxu0
    %v218 = vadd.f32 0.0, %v217
    %v219 = vpop.f32.mrf.mxu0
    %v220 = vadd.f32 0.0, %v219
    %v221 = vpop.f32.mrf.mxu0
    %v222 = vadd.f32 0.0, %v221
    %v223 = vpop.f32.mrf.mxu0
    %v224 = vadd.f32 0.0, %v223
    %225 = vmatprep.mubr.bf16.mxu0 0
    %226 = vmatmul.mubr.bf16.gmra.mxu0 %v80
    %v227 = vpop.f32.mrf.mxu0
    %v228 = vadd.f32 0.0, %v227
    %v229 = vpop.f32.mrf.mxu0
    %v230 = vadd.f32 0.0, %v229
    %v231 = vpop.f32.mrf.mxu0
    %v232 = vadd.f32 0.0, %v231
    %v233 = vpop.f32.mrf.mxu0
    %v234 = vadd.f32 0.0, %v233
    %235 = vmatprep.mubr.bf16.mxu0 0
    %236 = vmatmul.mubr.bf16.gmra.mxu0 %v81
    %v237 = vpop.f32.mrf.mxu0
    %v238 = vadd.f32 0.0, %v237
    %v239 = vpop.f32.mrf.mxu0
    %v240 = vadd.f32 0.0, %v239
    %v241 = vpop.f32.mrf.mxu0
    %v242 = vadd.f32 0.0, %v241
    %v243 = vpop.f32.mrf.mxu0
    %v244 = vadd.f32 0.0, %v243
    %245 = vmatprep.mubr.bf16.mxu0 0
    %246 = vmatmul.mubr.bf16.gmra.mxu0 %v82
    %v247 = vpop.f32.mrf.mxu0
    %v248 = vadd.f32 0.0, %v247
    %v249 = vpop.f32.mrf.mxu0
    %v250 = vadd.f32 0.0, %v249
    %v251 = vpop.f32.mrf.mxu0
    %v252 = vadd.f32 0.0, %v251
    %v253 = vpop.f32.mrf.mxu0
    %v254 = vadd.f32 0.0, %v253
    %255 = vmatprep.mubr.bf16.mxu0 0
    %256 = vmatmul.mubr.bf16.gmra.mxu0 %v83
    %v257 = vpop.f32.mrf.mxu0
    %v258 = vadd.f32 0.0, %v257
    %v259 = vpop.f32.mrf.mxu0
    %v260 = vadd.f32 0.0, %v259
    %v261 = vpop.f32.mrf.mxu0
    %v262 = vadd.f32 0.0, %v261
    %v263 = vpop.f32.mrf.mxu0
    %v264 = vadd.f32 0.0, %v263
    %265 = vmatprep.mubr.bf16.mxu0 0
    %266 = vmatmul.mubr.bf16.gmra.mxu0 %v84
    %v267 = vpop.f32.mrf.mxu0
    %v268 = vadd.f32 0.0, %v267
    %v269 = vpop.f32.mrf.mxu0
    %v270 = vadd.f32 0.0, %v269
    %v271 = vpop.f32.mrf.mxu0
    %v272 = vadd.f32 0.0, %v271
    %v273 = vpop.f32.mrf.mxu0
    %v274 = vadd.f32 0.0, %v273
    %275 = vmatprep.mubr.bf16.mxu0 0
    %276 = vmatmul.mubr.bf16.gmra.mxu0 %v85
    %v277 = vpop.f32.mrf.mxu0
    %v278 = vadd.f32 0.0, %v277
    %v279 = vpop.f32.mrf.mxu0
    %v280 = vadd.f32 0.0, %v279
    %v281 = vpop.f32.mrf.mxu0
    %v282 = vadd.f32 0.0, %v281
    %v283 = vpop.f32.mrf.mxu0
    %v284 = vadd.f32 0.0, %v283
    %285 = vmatprep.mubr.bf16.mxu0 0
    %286 = vmatmul.mubr.bf16.gmra.mxu0 %v86
    %v287 = vpop.f32.mrf.mxu0
    %v288 = vadd.f32 0.0, %v287
    %v289 = vpop.f32.mrf.mxu0
    %v290 = vadd.f32 0.0, %v289
    %v291 = vpop.f32.mrf.mxu0
    %v292 = vadd.f32 0.0, %v291
    %v293 = vpop.f32.mrf.mxu0
    %v294 = vadd.f32 0.0, %v293
    %295 = vdwg.mxu0
    %v296 = vld [vmem:[%s2] sm:$0x1]
    %v298 = vlaneseq
    %v299 = vshrl.u32 %v298, 7
    %v300 = vsub.s32 0, %v299
    %v301 = vrot.slane %v296, %v300
    %v303 = vadd.f32 %v218, %v301
    %v304 = vadd.f32 %v222, %v301
    %v305 = vadd.f32 %v228, %v301
    %v306 = vadd.f32 %v232, %v301
    %v307 = vadd.f32 %v238, %v301
    %v308 = vadd.f32 %v242, %v301
    %v309 = vadd.f32 %v248, %v301
    %v310 = vadd.f32 %v252, %v301
    %v311 = vadd.f32 %v258, %v301
    %v312 = vadd.f32 %v262, %v301
    %v313 = vadd.f32 %v268, %v301
    %v314 = vadd.f32 %v272, %v301
    %v315 = vadd.f32 %v278, %v301
    %v316 = vadd.f32 %v282, %v301
    %v317 = vadd.f32 %v288, %v301
    %v318 = vadd.f32 %v292, %v301
    %v319 = vmax.f32 %v303, 0.0
    %v320 = vmax.f32 %v304, 0.0
    %v321 = vmax.f32 %v305, 0.0
    %v322 = vmax.f32 %v306, 0.0
    %v323 = vmax.f32 %v307, 0.0
    %v324 = vmax.f32 %v308, 0.0
    %v325 = vmax.f32 %v309, 0.0
    %v326 = vmax.f32 %v310, 0.0
    %v327 = vmax.f32 %v311, 0.0
    %v328 = vmax.f32 %v312, 0.0
    %v329 = vmax.f32 %v313, 0.0
    %v330 = vmax.f32 %v314, 0.0
    %v331 = vmax.f32 %v315, 0.0
    %v332 = vmax.f32 %v316, 0.0
    %v333 = vmax.f32 %v317, 0.0
    %v334 = vmax.f32 %v318, 0.0
    %v335 = vpack.c.bf16 %v320, %v319
    %v336 = vpack.c.bf16 %v322, %v321
    %v337 = vpack.c.bf16 %v324, %v323
    %v338 = vpack.c.bf16 %v326, %v325
    %v339 = vpack.c.bf16 %v328, %v327
    %v340 = vpack.c.bf16 %v330, %v329
    %v341 = vpack.c.bf16 %v332, %v331
    %v342 = vpack.c.bf16 %v334, %v333
    %v343 = vld [vmem:[#allocation7] sm:$0xff]
    %v344 = vld [vmem:[#allocation7 + $0x8] sm:$0xf]
    %v345 = vld [vmem:[#allocation7 + $0xc] sm:$0xff]
    %v346 = vld [vmem:[#allocation7 + $0x14] sm:$0xf]
    %v347 = vld [vmem:[#allocation7 + $0x18] sm:$0xff]
    %v348 = vld [vmem:[#allocation7 + $0x20] sm:$0xf]
    %v349 = vld [vmem:[#allocation7 + $0x24] sm:$0xff]
    %v350 = vld [vmem:[#allocation7 + $0x2c] sm:$0xf]
    %v351 = vld [vmem:[#allocation7 + $0x30] sm:$0xff]
    %v352 = vld [vmem:[#allocation7 + $0x38] sm:$0xf]
    %v353 = vld [vmem:[#allocation7 + $0x3c] sm:$0xff]
    %v354 = vld [vmem:[#allocation7 + $0x44] sm:$0xf]
    %v355 = vld [vmem:[#allocation7 + $0x48] sm:$0xff]
    %v356 = vld [vmem:[#allocation7 + $0x50] sm:$0xf]
    %v357 = vld [vmem:[#allocation7 + $0x54] sm:$0xff]
    %v358 = vld [vmem:[#allocation7 + $0x5c] sm:$0xf]
    %v359 = vld [vmem:[#allocation7 + $0x60] sm:$0xff]
    %v360 = vld [vmem:[#allocation7 + $0x68] sm:$0xf]
    %v361 = vld [vmem:[#allocation7 + $0x6c] sm:$0xff]
    %v362 = vld [vmem:[#allocation7 + $0x74] sm:$0xf]
    %v363 = vld [vmem:[#allocation7 + $0x78] sm:$0xff]
    %v364 = vld [vmem:[#allocation7 + $0x80] sm:$0xf]
    %v365 = vld [vmem:[#allocation7 + $0x84] sm:$0xff]
    %v366 = vld [vmem:[#allocation7 + $0x8c] sm:$0xf]
    %v367 = vld [vmem:[#allocation7 + $0x90] sm:$0xff]
    %v368 = vld [vmem:[#allocation7 + $0x98] sm:$0xf]
    %v369 = vld [vmem:[#allocation7 + $0x9c] sm:$0xff]
    %v370 = vld [vmem:[#allocation7 + $0xa4] sm:$0xf]
    %v371 = vld [vmem:[#allocation7 + $0xa8] sm:$0xff]
    %v372 = vld [vmem:[#allocation7 + $0xb0] sm:$0xf]
    %v373 = vld [vmem:[#allocation7 + $0xb4] sm:$0xff]
    %v374 = vld [vmem:[#allocation7 + $0xbc] sm:$0xf]
    %v407 = vunpack.c.l.b16 %v343
    %v408 = vunpack.c.h.b16 %v343
    %v409 = vunpack.c.l.b16 %v344
    %v410 = vunpack.c.l.b16 %v345
    %v411 = vunpack.c.h.b16 %v345
    %v412 = vunpack.c.l.b16 %v346
    %v413 = vunpack.c.l.b16 %v347
    %v414 = vunpack.c.h.b16 %v347
    %v415 = vunpack.c.l.b16 %v348
    %v416 = vunpack.c.l.b16 %v349
    %v417 = vunpack.c.h.b16 %v349
    %v418 = vunpack.c.l.b16 %v350
    %v419 = vunpack.c.l.b16 %v351
    %v420 = vunpack.c.h.b16 %v351
    %v421 = vunpack.c.l.b16 %v352
    %v422 = vunpack.c.l.b16 %v353
    %v423 = vunpack.c.h.b16 %v353
    %v424 = vunpack.c.l.b16 %v354
    %v425 = vunpack.c.l.b16 %v355
    %v426 = vunpack.c.h.b16 %v355
    %v427 = vunpack.c.l.b16 %v356
    %v428 = vunpack.c.l.b16 %v357
    %v429 = vunpack.c.h.b16 %v357
    %v430 = vunpack.c.l.b16 %v358
    %v431 = vunpack.c.l.b16 %v359
    %v432 = vunpack.c.h.b16 %v359
    %v433 = vunpack.c.l.b16 %v360
    %v434 = vunpack.c.l.b16 %v361
    %v435 = vunpack.c.h.b16 %v361
    %v436 = vunpack.c.l.b16 %v362
    %v437 = vunpack.c.l.b16 %v363
    %v438 = vunpack.c.h.b16 %v363
    %v439 = vunpack.c.l.b16 %v364
    %v440 = vunpack.c.l.b16 %v365
    %v441 = vunpack.c.h.b16 %v365
    %v442 = vunpack.c.l.b16 %v366
    %v443 = vunpack.c.l.b16 %v367
    %v444 = vunpack.c.h.b16 %v367
    %v445 = vunpack.c.l.b16 %v368
    %v446 = vunpack.c.l.b16 %v369
    %v447 = vunpack.c.h.b16 %v369
    %v448 = vunpack.c.l.b16 %v370
    %v449 = vunpack.c.l.b16 %v371
    %v450 = vunpack.c.h.b16 %v371
    %v451 = vunpack.c.l.b16 %v372
    %v452 = vunpack.c.l.b16 %v373
    %v453 = vunpack.c.h.b16 %v373
    %v454 = vunpack.c.l.b16 %v374
    %v455 = vpack.c.b16 %v410, %v407
    %v456 = vpack.c.b16 %v411, %v408
    %v457 = vpack.c.b16 %v412, %v409
    %v458 = vpack.c.b16 %v416, %v413
    %v459 = vpack.c.b16 %v417, %v414
    %v460 = vpack.c.b16 %v418, %v415
    %v461 = vpack.c.b16 %v422, %v419
    %v462 = vpack.c.b16 %v423, %v420
    %v463 = vpack.c.b16 %v424, %v421
    %v464 = vpack.c.b16 %v428, %v425
    %v465 = vpack.c.b16 %v429, %v426
    %v466 = vpack.c.b16 %v430, %v427
    %v467 = vpack.c.b16 %v434, %v431
    %v468 = vpack.c.b16 %v435, %v432
    %v469 = vpack.c.b16 %v436, %v433
    %v470 = vpack.c.b16 %v440, %v437
    %v471 = vpack.c.b16 %v441, %v438
    %v472 = vpack.c.b16 %v442, %v439
    %v473 = vpack.c.b16 %v446, %v443
    %v474 = vpack.c.b16 %v447, %v444
    %v475 = vpack.c.b16 %v448, %v445
    %v476 = vpack.c.b16 %v452, %v449
    %v477 = vpack.c.b16 %v453, %v450
    %v478 = vpack.c.b16 %v454, %v451
    %503 = vmatprep.subr.bf16.mxu0 %v477
    %504 = vmatpush1.bf16.msra.mxu0 %v476
    %505 = vmatprep.subr.bf16.mxu0 %v474
    %506 = vmatpush1.bf16.msra.mxu0 %v473
    %507 = vmatprep.subr.bf16.mxu0 %v471
    %508 = vmatpush1.bf16.msra.mxu0 %v470
    %509 = vmatprep.subr.bf16.mxu0 %v468
    %510 = vmatpush1.bf16.msra.mxu0 %v467
    %511 = vmatprep.subr.bf16.mxu0 %v465
    %512 = vmatpush1.bf16.msra.mxu0 %v464
    %513 = vmatprep.subr.bf16.mxu0 %v462
    %514 = vmatpush1.bf16.msra.mxu0 %v461
    %515 = vmatprep.subr.bf16.mxu0 %v459
    %516 = vmatpush1.bf16.msra.mxu0 %v458
    %517 = vmatprep.subr.bf16.mxu0 %v456
    %518 = vmatpush1.bf16.msra.mxu0 %v455
    %519 = vmatprep.subr.bf16.mxu0 0
    %520 = vmatpush2.bf16.msra.mxu0 0
    %521 = vmatprep.subr.bf16.mxu0 0
    %522 = vmatpush2.bf16.msra.mxu0 0
    %523 = vmatprep.subr.bf16.mxu0 0
    %524 = vmatpush2.bf16.msra.mxu0 0
    %525 = vmatprep.subr.bf16.mxu0 0
    %526 = vmatpush2.bf16.msra.mxu0 0
    %527 = vmatprep.subr.bf16.mxu0 0
    %528 = vmatpush2.bf16.msra.mxu0 0
    %529 = vmatprep.subr.bf16.mxu0 0
    %530 = vmatpush2.bf16.msra.mxu0 0
    %531 = vmatprep.subr.bf16.mxu0 0
    %532 = vmatpush2.bf16.msra.mxu0 0
    %533 = vmatprep.subr.bf16.mxu0 0
    %534 = vmatpush2.bf16.msra.mxu0 0
    %535 = vmatprep.mubr.bf16.mxu0 0
    %536 = vmatmul.mubr.bf16.gmra.mxu0 %v335
    %v537 = vpop.f32.mrf.mxu0
    %v538 = vadd.f32 0.0, %v537
    %v539 = vpop.f32.mrf.mxu0
    %v540 = vadd.f32 0.0, %v539
    %v541 = vpop.f32.mrf.mxu0
    %v542 = vadd.f32 0.0, %v541
    %v543 = vpop.f32.mrf.mxu0
    %v544 = vadd.f32 0.0, %v543
    %545 = vmatprep.mubr.bf16.mxu0 0
    %546 = vmatmul.mubr.bf16.gmra.mxu0 %v336
    %v547 = vpop.f32.mrf.mxu0
    %v548 = vadd.f32 0.0, %v547
    %v549 = vpop.f32.mrf.mxu0
    %v550 = vadd.f32 0.0, %v549
    %v551 = vpop.f32.mrf.mxu0
    %v552 = vadd.f32 0.0, %v551
    %v553 = vpop.f32.mrf.mxu0
    %v554 = vadd.f32 0.0, %v553
    %555 = vmatprep.mubr.bf16.mxu0 0
    %556 = vmatmul.mubr.bf16.gmra.mxu0 %v337
    %v557 = vpop.f32.mrf.mxu0
    %v558 = vadd.f32 0.0, %v557
    %v559 = vpop.f32.mrf.mxu0
    %v560 = vadd.f32 0.0, %v559
    %v561 = vpop.f32.mrf.mxu0
    %v562 = vadd.f32 0.0, %v561
    %v563 = vpop.f32.mrf.mxu0
    %v564 = vadd.f32 0.0, %v563
    %565 = vmatprep.mubr.bf16.mxu0 0
    %566 = vmatmul.mubr.bf16.gmra.mxu0 %v338
    %v567 = vpop.f32.mrf.mxu0
    %v568 = vadd.f32 0.0, %v567
    %v569 = vpop.f32.mrf.mxu0
    %v570 = vadd.f32 0.0, %v569
    %v571 = vpop.f32.mrf.mxu0
    %v572 = vadd.f32 0.0, %v571
    %v573 = vpop.f32.mrf.mxu0
    %v574 = vadd.f32 0.0, %v573
    %575 = vmatprep.mubr.bf16.mxu0 0
    %576 = vmatmul.mubr.bf16.gmra.mxu0 %v339
    %v577 = vpop.f32.mrf.mxu0
    %v578 = vadd.f32 0.0, %v577
    %v579 = vpop.f32.mrf.mxu0
    %v580 = vadd.f32 0.0, %v579
    %v581 = vpop.f32.mrf.mxu0
    %v582 = vadd.f32 0.0, %v581
    %v583 = vpop.f32.mrf.mxu0
    %v584 = vadd.f32 0.0, %v583
    %585 = vmatprep.mubr.bf16.mxu0 0
    %586 = vmatmul.mubr.bf16.gmra.mxu0 %v340
    %v587 = vpop.f32.mrf.mxu0
    %v588 = vadd.f32 0.0, %v587
    %v589 = vpop.f32.mrf.mxu0
    %v590 = vadd.f32 0.0, %v589
    %v591 = vpop.f32.mrf.mxu0
    %v592 = vadd.f32 0.0, %v591
    %v593 = vpop.f32.mrf.mxu0
    %v594 = vadd.f32 0.0, %v593
    %595 = vmatprep.mubr.bf16.mxu0 0
    %596 = vmatmul.mubr.bf16.gmra.mxu0 %v341
    %v597 = vpop.f32.mrf.mxu0
    %v598 = vadd.f32 0.0, %v597
    %v599 = vpop.f32.mrf.mxu0
    %v600 = vadd.f32 0.0, %v599
    %v601 = vpop.f32.mrf.mxu0
    %v602 = vadd.f32 0.0, %v601
    %v603 = vpop.f32.mrf.mxu0
    %v604 = vadd.f32 0.0, %v603
    %605 = vmatprep.mubr.bf16.mxu0 0
    %606 = vmatmul.mubr.bf16.gmra.mxu0 %v342
    %v607 = vpop.f32.mrf.mxu0
    %v608 = vadd.f32 0.0, %v607
    %v609 = vpop.f32.mrf.mxu0
    %v610 = vadd.f32 0.0, %v609
    %v611 = vpop.f32.mrf.mxu0
    %v612 = vadd.f32 0.0, %v611
    %v613 = vpop.f32.mrf.mxu0
    %v614 = vadd.f32 0.0, %v613
    %615 = vdwg.mxu0
    %616 = vmatprep.subr.bf16.mxu0 0
    %617 = vmatpush1.bf16.msra.mxu0 %v478
    %618 = vmatprep.subr.bf16.mxu0 0
    %619 = vmatpush1.bf16.msra.mxu0 %v475
    %620 = vmatprep.subr.bf16.mxu0 0
    %621 = vmatpush1.bf16.msra.mxu0 %v472
    %622 = vmatprep.subr.bf16.mxu0 0
    %623 = vmatpush1.bf16.msra.mxu0 %v469
    %624 = vmatprep.subr.bf16.mxu0 0
    %625 = vmatpush1.bf16.msra.mxu0 %v466
    %626 = vmatprep.subr.bf16.mxu0 0
    %627 = vmatpush1.bf16.msra.mxu0 %v463
    %628 = vmatprep.subr.bf16.mxu0 0
    %629 = vmatpush1.bf16.msra.mxu0 %v460
    %630 = vmatprep.subr.bf16.mxu0 0
    %631 = vmatpush1.bf16.msra.mxu0 %v457
    %632 = vmatprep.subr.bf16.mxu0 0
    %633 = vmatpush2.bf16.msra.mxu0 0
    %634 = vmatprep.subr.bf16.mxu0 0
    %635 = vmatpush2.bf16.msra.mxu0 0
    %636 = vmatprep.subr.bf16.mxu0 0
    %637 = vmatpush2.bf16.msra.mxu0 0
    %638 = vmatprep.subr.bf16.mxu0 0
    %639 = vmatpush2.bf16.msra.mxu0 0
    %640 = vmatprep.subr.bf16.mxu0 0
    %641 = vmatpush2.bf16.msra.mxu0 0
    %642 = vmatprep.subr.bf16.mxu0 0
    %643 = vmatpush2.bf16.msra.mxu0 0
    %644 = vmatprep.subr.bf16.mxu0 0
    %645 = vmatpush2.bf16.msra.mxu0 0
    %646 = vmatprep.subr.bf16.mxu0 0
    %647 = vmatpush2.bf16.msra.mxu0 0
    %648 = vmatprep.mubr.bf16.mxu0 0
    %649 = vmatmul.mubr.bf16.gmra.mxu0 %v335
    %v650 = vpop.f32.mrf.mxu0
    %v651 = vadd.f32 0.0, %v650
    %v652 = vpop.f32.mrf.mxu0
    %v653 = vpop.f32.mrf.mxu0
    %v654 = vadd.f32 0.0, %v653
    %v655 = vpop.f32.mrf.mxu0
    %656 = vmatprep.mubr.bf16.mxu0 0
    %657 = vmatmul.mubr.bf16.gmra.mxu0 %v336
    %v658 = vpop.f32.mrf.mxu0
    %v659 = vadd.f32 0.0, %v658
    %v660 = vpop.f32.mrf.mxu0
    %v661 = vpop.f32.mrf.mxu0
    %v662 = vadd.f32 0.0, %v661
    %v663 = vpop.f32.mrf.mxu0
    %664 = vmatprep.mubr.bf16.mxu0 0
    %665 = vmatmul.mubr.bf16.gmra.mxu0 %v337
    %v666 = vpop.f32.mrf.mxu0
    %v667 = vadd.f32 0.0, %v666
    %v668 = vpop.f32.mrf.mxu0
    %v669 = vpop.f32.mrf.mxu0
    %v670 = vadd.f32 0.0, %v669
    %v671 = vpop.f32.mrf.mxu0
    %672 = vmatprep.mubr.bf16.mxu0 0
    %673 = vmatmul.mubr.bf16.gmra.mxu0 %v338
    %v674 = vpop.f32.mrf.mxu0
    %v675 = vadd.f32 0.0, %v674
    %v676 = vpop.f32.mrf.mxu0
    %v677 = vpop.f32.mrf.mxu0
    %v678 = vadd.f32 0.0, %v677
    %v679 = vpop.f32.mrf.mxu0
    %680 = vmatprep.mubr.bf16.mxu0 0
    %681 = vmatmul.mubr.bf16.gmra.mxu0 %v339
    %v682 = vpop.f32.mrf.mxu0
    %v683 = vadd.f32 0.0, %v682
    %v684 = vpop.f32.mrf.mxu0
    %v685 = vpop.f32.mrf.mxu0
    %v686 = vadd.f32 0.0, %v685
    %v687 = vpop.f32.mrf.mxu0
    %688 = vmatprep.mubr.bf16.mxu0 0
    %689 = vmatmul.mubr.bf16.gmra.mxu0 %v340
    %v690 = vpop.f32.mrf.mxu0
    %v691 = vadd.f32 0.0, %v690
    %v692 = vpop.f32.mrf.mxu0
    %v693 = vpop.f32.mrf.mxu0
    %v694 = vadd.f32 0.0, %v693
    %v695 = vpop.f32.mrf.mxu0
    %696 = vmatprep.mubr.bf16.mxu0 0
    %697 = vmatmul.mubr.bf16.gmra.mxu0 %v341
    %v698 = vpop.f32.mrf.mxu0
    %v699 = vadd.f32 0.0, %v698
    %v700 = vpop.f32.mrf.mxu0
    %v701 = vpop.f32.mrf.mxu0
    %v702 = vadd.f32 0.0, %v701
    %v703 = vpop.f32.mrf.mxu0
    %704 = vmatprep.mubr.bf16.mxu0 0
    %705 = vmatmul.mubr.bf16.gmra.mxu0 %v342
    %v706 = vpop.f32.mrf.mxu0
    %v707 = vadd.f32 0.0, %v706
    %v708 = vpop.f32.mrf.mxu0
    %v709 = vpop.f32.mrf.mxu0
    %v710 = vadd.f32 0.0, %v709
    %v711 = vpop.f32.mrf.mxu0
    %712 = vdwg.mxu0
    %713 = vst [vmem:[#allocation8] sm:$0xff] %v538
    %714 = vst [vmem:[#allocation8 + $0x10] sm:$0xff] %v542
    %715 = vst [vmem:[#allocation8 + $0x20] sm:$0xff] %v548
    %716 = vst [vmem:[#allocation8 + $0x30] sm:$0xff] %v552
    %717 = vst [vmem:[#allocation8 + $0x40] sm:$0xff] %v558
    %718 = vst [vmem:[#allocation8 + $0x50] sm:$0xff] %v562
    %719 = vst [vmem:[#allocation8 + $0x60] sm:$0xff] %v568
    %720 = vst [vmem:[#allocation8 + $0x70] sm:$0xff] %v572
    %721 = vst [vmem:[#allocation8 + $0x80] sm:$0xff] %v578
    %722 = vst [vmem:[#allocation8 + $0x90] sm:$0xff] %v582
    %723 = vst [vmem:[#allocation8 + $0xa0] sm:$0xff] %v588
    %724 = vst [vmem:[#allocation8 + $0xb0] sm:$0xff] %v592
    %725 = vst [vmem:[#allocation8 + $0xc0] sm:$0xff] %v598
    %726 = vst [vmem:[#allocation8 + $0xd0] sm:$0xff] %v602
    %727 = vst [vmem:[#allocation8 + $0xe0] sm:$0xff] %v608
    %728 = vst [vmem:[#allocation8 + $0xf0] sm:$0xff] %v612
    %729 = vst [vmem:[#allocation8 + $0x8] sm:$0xff] %v220
    %730 = vst [vmem:[#allocation8 + $0x18] sm:$0xff] %v224
    %731 = vst [vmem:[#allocation8 + $0x28] sm:$0xff] %v230
    %732 = vst [vmem:[#allocation8 + $0x38] sm:$0xff] %v234
    %733 = vst [vmem:[#allocation8 + $0x48] sm:$0xff] %v240
    %734 = vst [vmem:[#allocation8 + $0x58] sm:$0xff] %v244
    %735 = vst [vmem:[#allocation8 + $0x68] sm:$0xff] %v250
    %736 = vst [vmem:[#allocation8 + $0x78] sm:$0xff] %v254
    %737 = vst [vmem:[#allocation8 + $0x88] sm:$0xff] %v260
    %738 = vst [vmem:[#allocation8 + $0x98] sm:$0xff] %v264
    %739 = vst [vmem:[#allocation8 + $0xa8] sm:$0xff] %v270
    %740 = vst [vmem:[#allocation8 + $0xb8] sm:$0xff] %v274
    %741 = vst [vmem:[#allocation8 + $0xc8] sm:$0xff] %v280
    %742 = vst [vmem:[#allocation8 + $0xd8] sm:$0xff] %v284
    %743 = vst [vmem:[#allocation8 + $0xe8] sm:$0xff] %v290
    %744 = vst [vmem:[#allocation8 + $0xf8] sm:$0xff] %v294
    %745 = vst [vmem:[#allocation9] sm:$0xff] %v540
    %746 = vst [vmem:[#allocation9 + $0x8] sm:$0xff] %v651
    %747 = vst [vmem:[#allocation9 + $0x10] sm:$0xff] %v544
    %748 = vst [vmem:[#allocation9 + $0x18] sm:$0xff] %v654
    %749 = vst [vmem:[#allocation9 + $0x20] sm:$0xff] %v550
    %750 = vst [vmem:[#allocation9 + $0x28] sm:$0xff] %v659
    %751 = vst [vmem:[#allocation9 + $0x30] sm:$0xff] %v554
    %752 = vst [vmem:[#allocation9 + $0x38] sm:$0xff] %v662
    %753 = vst [vmem:[#allocation9 + $0x40] sm:$0xff] %v560
    %754 = vst [vmem:[#allocation9 + $0x48] sm:$0xff] %v667
    %755 = vst [vmem:[#allocation9 + $0x50] sm:$0xff] %v564
    %756 = vst [vmem:[#allocation9 + $0x58] sm:$0xff] %v670
    %757 = vst [vmem:[#allocation9 + $0x60] sm:$0xff] %v570
    %758 = vst [vmem:[#allocation9 + $0x68] sm:$0xff] %v675
    %759 = vst [vmem:[#allocation9 + $0x70] sm:$0xff] %v574
    %760 = vst [vmem:[#allocation9 + $0x78] sm:$0xff] %v678
    %761 = vst [vmem:[#allocation9 + $0x80] sm:$0xff] %v580
    %762 = vst [vmem:[#allocation9 + $0x88] sm:$0xff] %v683
    %763 = vst [vmem:[#allocation9 + $0x90] sm:$0xff] %v584
    %764 = vst [vmem:[#allocation9 + $0x98] sm:$0xff] %v686
    %765 = vst [vmem:[#allocation9 + $0xa0] sm:$0xff] %v590
    %766 = vst [vmem:[#allocation9 + $0xa8] sm:$0xff] %v691
    %767 = vst [vmem:[#allocation9 + $0xb0] sm:$0xff] %v594
    %768 = vst [vmem:[#allocation9 + $0xb8] sm:$0xff] %v694
    %769 = vst [vmem:[#allocation9 + $0xc0] sm:$0xff] %v600
    %770 = vst [vmem:[#allocation9 + $0xc8] sm:$0xff] %v699
    %771 = vst [vmem:[#allocation9 + $0xd0] sm:$0xff] %v604
    %772 = vst [vmem:[#allocation9 + $0xd8] sm:$0xff] %v702
    %773 = vst [vmem:[#allocation9 + $0xe0] sm:$0xff] %v610
    %774 = vst [vmem:[#allocation9 + $0xe8] sm:$0xff] %v707
    %775 = vst [vmem:[#allocation9 + $0xf0] sm:$0xff] %v614
    %776 = vst [vmem:[#allocation9 + $0xf8] sm:$0xff] %v710
    // Predicated region
    $region30: #{tpu_custom_call.1} parent=1 // pred_check
      _
    $region31: #{tpu_custom_call.1} parent=1 // pred_check_branch
      %778 = sbr.rel (0) target = $region33
    $region32: #{tpu_custom_call.1} parent=1 // pred_region
      %s780 = ssub.s32 4096, 4096
      %781 = vsyncadd [#allocation4], %s780
      %s782 = sshll.u32 [#allocation8], 4
      %s783 = int_to_ptr.vmem [resolvable:$true] %s782
      %788 = dma.vmem_to_hbm [thread:$0]  %s783, 4096, %s4, [#allocation4], 256, 256, 16
    $region33: #{tpu_custom_call.1} parent=1 // pred_fallthru
      _
    // Predicated region
    $region34: #{tpu_custom_call.1} parent=1 // pred_check
      _
    $region35: #{tpu_custom_call.1} parent=1 // pred_check_branch
      %790 = sbr.rel (0) target = $region37
    $region36: #{tpu_custom_call.1} parent=1 // pred_region
      %s792 = ssub.s32 4096, 4096
      %793 = vsyncadd [#allocation10], %s792
      %s794 = sshll.u32 [#allocation9], 4
      %s795 = int_to_ptr.vmem [resolvable:$true] %s794
      %800 = dma.vmem_to_hbm [thread:$0]  %s795, 4096, %s5, [#allocation10], 256, 256, 16
    $region37: #{tpu_custom_call.1} parent=1 // pred_fallthru
      _
    // Predicated region
    $region38: #{tpu_custom_call.1} parent=1 // pred_check
      _
    $region39: #{tpu_custom_call.1} parent=1 // pred_check_branch
      %802 = sbr.rel (0) target = $region41
    $region40: #{tpu_custom_call.1} parent=1 // pred_region
      %803 = dma.done [#allocation4], 4096
    $region41: #{tpu_custom_call.1} parent=1 // pred_fallthru
      _
    // Predicated region
    $region42: #{tpu_custom_call.1} parent=1 // pred_check
      _
    $region43: #{tpu_custom_call.1} parent=1 // pred_check_branch
      %805 = sbr.rel (0) target = $region45
    $region44: #{tpu_custom_call.1} parent=1 // pred_region
      %806 = dma.done [#allocation10], 4096
    $region45: #{tpu_custom_call.1} parent=1 // pred_fallthru
      _
    %807 = vsyncpa [#allocation3], 1
    %808 = vsyncpa [#allocation6], 1
    %809 = vsyncpa [#allocation4], 1
    %810 = vsyncpa [#allocation10], 1

</llo_original>
